<compile_context>
chip_gen: v5e
topology: v5e:2x2
jax: 0.10.0
libtpu: 0.0.40
codegen_flags: <defaults>
</compile_context>

<pallas_src>
import functools

import jax
import jax.numpy as jnp
import numpy as np
from jax.experimental import pallas as pl
from jax.experimental.pallas import tpu as pltpu


# ----------------------------------------------------------------------------
# Pallas kernel: single invocation, in-kernel loop over time, both LSTM
# directions advanced by one fused block-diagonal matmul per step.
# Gate column layout (width H each): [f_f f_b i_f i_b o_f o_b g_f g_b],
# with the g columns pre-scaled by 2 so tanh(z) = 2*sigmoid(2z) - 1.
# ----------------------------------------------------------------------------
def _bilstm_kernel(xg_ref, whh_ref, out_ref, bridge_h_ref, bridge_c_ref,
                   *, hidden_size, seq_len, unroll):
    H = hidden_size
    G = 8 * H

    whh = whh_ref[...]                                   # (2H, 8H), loaded once

    # lanes [6H, 8H) hold the (pre-scaled) cell-candidate gates of both
    # directions -> 2*sigmoid - 1; everything else -> sigmoid.
    lane = jax.lax.broadcasted_iota(jnp.int32, (1, G), 1)
    g_mask = lane >= 6 * H

    def step(t, carry):
        h, c = carry                                     # (1, 2H) vreg-resident
        # Row t of xg already holds (input projection + bias) for the forward
        # direction at position t AND the backward direction at position
        # seq_len-1-t, so one (1,2H)@(2H,8H) matmul advances both directions.
        xg_t = xg_ref[pl.ds(t, 1), :]                    # (1, 8H)
        gates = jnp.dot(h.astype(whh.dtype), whh,
                        preferred_element_type=jnp.float32) + xg_t
        s = jax.nn.sigmoid(gates)                        # single EUP pass
        act = jnp.where(g_mask, 2.0 * s - 1.0, s)

        f = act[:, 0 * H:2 * H]                          # lane offset 0 (vreg 0)
        i = act[:, 2 * H:4 * H]
        o = act[:, 4 * H:6 * H]                          # lane offset 0 (vreg 1)
        g = act[:, 6 * H:8 * H]

        c_new = f * c + i * g                            # full-width (1, 2H)
        h_new = o * jnp.tanh(c_new)

        # One 2H-wide store per step: [h_fwd(t) | h_bwd(processing step t)].
        out_ref[pl.ds(t, 1), :] = h_new
        return (h_new, c_new)

    h0 = jnp.zeros((1, 2 * H), jnp.float32)
    c0 = jnp.zeros((1, 2 * H), jnp.float32)
    h_fin, c_fin = jax.lax.fori_loop(0, seq_len, step, (h0, c0), unroll=unroll)

    # Bridge = final state of the *reverse* direction (after consuming x[0]).
    bridge_h_ref[...] = h_fin[:, H:2 * H]
    bridge_c_ref[...] = c_fin[:, H:2 * H]


# ----------------------------------------------------------------------------
# One-time parameter preparation: fuse / reorder / pre-scale all constants.
# PyTorch LSTM gate order in the 4H axis is [i f g o]; fused order is
# [f_f f_b i_f i_b o_f o_b g_f g_b] with g columns scaled by 2.
# ----------------------------------------------------------------------------
def _split_gates(w_t, H):
    # w_t: (R, 4H) with columns [i f g o] -> four (R, H) blocks
    return (w_t[:, 0 * H:1 * H], w_t[:, 1 * H:2 * H],
            w_t[:, 2 * H:3 * H], w_t[:, 3 * H:4 * H])


def prepare_encoder_params(params, hidden_size, use_bf16_recurrent=False):
    H = hidden_size
    z = jnp.zeros((H, H), jnp.float32)

    def fuse(w_f, w_b):
        # w_*: (4H, H). Returns (2H, 8H); rows [0,H) act on the fwd stream,
        # rows [H,2H) on the bwd stream. g columns pre-scaled by 2.
        i_f, f_f, g_f, o_f = _split_gates(w_f.T.astype(jnp.float32), H)
        i_b, f_b, g_b, o_b = _split_gates(w_b.T.astype(jnp.float32), H)
        top = jnp.concatenate([f_f, z, i_f, z, o_f, z, 2.0 * g_f, z], axis=1)
        bot = jnp.concatenate([z, f_b, z, i_b, z, o_b, z, 2.0 * g_b], axis=1)
        return jnp.concatenate([top, bot], axis=0)               # (2H, 8H)

    whh_bd = fuse(params["w_hh_fwd"], params["w_hh_bwd"])        # recurrent
    w_ih_fused = fuse(params["w_ih_fwd"], params["w_ih_bwd"])    # input proj

    b_f = (params["b_ih_fwd"] + params["b_hh_fwd"]).astype(jnp.float32)  # (4H,)
    b_b = (params["b_ih_bwd"] + params["b_hh_bwd"]).astype(jnp.float32)
    bias_fused = jnp.concatenate([
        b_f[1 * H:2 * H], b_b[1 * H:2 * H],          # f
        b_f[0 * H:1 * H], b_b[0 * H:1 * H],          # i
        b_f[3 * H:4 * H], b_b[3 * H:4 * H],          # o
        2.0 * b_f[2 * H:3 * H], 2.0 * b_b[2 * H:3 * H],  # g (pre-scaled)
    ])[None, :]                                       # (1, 8H)

    if use_bf16_recurrent:
        # TODO(synk): loosens the 1e-5 tolerance vs. the fp32 reference.
        whh_bd = whh_bd.astype(jnp.bfloat16)

    return {
        "embedding": params["embedding"].astype(jnp.float32),
        "whh_bd": whh_bd,
        "w_ih_fused": w_ih_fused,
        "bias_fused": bias_fused,
    }


# ----------------------------------------------------------------------------
# Per-call wrapper: embedding lookup + ONE hoisted input-projection matmul
# (bias folded in) in plain JAX; the serial recurrence runs in the kernel.
# ----------------------------------------------------------------------------
def encoder_rnn_forward(word_inputs, fused, hidden_size):
    H = hidden_size
    S = int(word_inputs.shape[0])

    # embedding(word_inputs).view(seq_len, 1, -1); dropout == identity (eval)
    x = fused["embedding"][word_inputs]                           # (S, H)

    # Hoisted input projection for both directions in one matmul:
    # row t of x2 = [x[t] | x[S-1-t]]; w_ih_fused routes each half to its
    # direction's (gate-interleaved, g-prescaled) columns; bias folded in.
    x2 = jnp.concatenate([x, x[::-1]], axis=1)                    # (S, 2H)
    xg = x2 @ fused["w_ih_fused"] + fused["bias_fused"]           # (S, 8H)
    xg = xg.astype(jnp.float32)

    unroll = True if S <= 32 else 4
    kernel = functools.partial(_bilstm_kernel, hidden_size=H, seq_len=S,
                               unroll=unroll)
    vmem = pl.BlockSpec(memory_space=pltpu.MemorySpace.VMEM)

    out, bridge_h, bridge_c = pl.pallas_call(
        kernel,
        out_shape=(
            jax.ShapeDtypeStruct((S, 2 * H), jnp.float32),  # [fwd(t) | bwd(S-1-t)]
            jax.ShapeDtypeStruct((1, H), jnp.float32),      # bridge hidden
            jax.ShapeDtypeStruct((1, H), jnp.float32),      # bridge cell
        ),
        in_specs=[vmem, vmem],
        out_specs=(vmem, vmem, vmem),
    )(xg, fused["whh_bd"])

    # Re-order the backward half back into input-position order in the wrapper.
    output = jnp.concatenate([out[:, 0:H], out[::-1, H:2 * H]],
                             axis=-1)[:, None, :]                 # (S, 1, 2H)
    bridge_hidden = bridge_h.reshape(1, 1, H)   # final_hidden[1].unsqueeze(0)
    bridge_cell = bridge_c.reshape(1, 1, H)     # final_cell[1].unsqueeze(0)
    return output, bridge_hidden, bridge_cell


# ----------------------------------------------------------------------------
# Pure-JAX reference (lax.scan) for correctness checking.
# ----------------------------------------------------------------------------
def _lstm_ref_dir(x_seq, wih, whh, b_ih, b_hh, reverse):
    H = whh.shape[1]

    def step(carry, x):
        h, c = carry
        gates = x @ wih.T + h @ whh.T + b_ih + b_hh
        i, f, g, o = jnp.split(gates, 4)
        i = jax.nn.sigmoid(i)
        f = jax.nn.sigmoid(f)
        g = jnp.tanh(g)
        o = jax.nn.sigmoid(o)
        c = f * c + i * g
        h = o * jnp.tanh(c)
        return (h, c), h

    (hT, cT), hs = jax.lax.scan(step, (jnp.zeros(H), jnp.zeros(H)),
                                x_seq, reverse=reverse)
    return hs, hT, cT


def encoder_rnn_reference(word_inputs, params, hidden_size):
    x = params["embedding"][word_inputs].astype(jnp.float32)        # (S, H)
    hs_f, _, _ = _lstm_ref_dir(x, params["w_ih_fwd"], params["w_hh_fwd"],
                               params["b_ih_fwd"], params["b_hh_fwd"], False)
    hs_b, hT_b, cT_b = _lstm_ref_dir(x, params["w_ih_bwd"], params["w_hh_bwd"],
                                     params["b_ih_bwd"], params["b_hh_bwd"], True)
    out = jnp.concatenate([hs_f, hs_b], axis=-1)[:, None, :]
    return out, hT_b[None, None, :], cT_b[None, None, :]


# ----------------------------------------------------------------------------
def init_params(key, input_size, hidden_size):
    H = hidden_size
    bound = 1.0 / np.sqrt(H)
    keys = jax.random.split(key, 9)
    u = lambda k, shape: jax.random.uniform(k, shape, jnp.float32, -bound, bound)
    return {
        "embedding": jax.random.normal(keys[0], (input_size, H), jnp.float32),
        "w_ih_fwd": u(keys[1], (4 * H, H)),
        "w_hh_fwd": u(keys[2], (4 * H, H)),
        "b_ih_fwd": u(keys[3], (4 * H,)),
        "b_hh_fwd": u(keys[4], (4 * H,)),
        "w_ih_bwd": u(keys[5], (4 * H, H)),
        "w_hh_bwd": u(keys[6], (4 * H, H)),
        "b_ih_bwd": u(keys[7], (4 * H,)),
        "b_hh_bwd": u(keys[8], (4 * H,)),
    }


if __name__ == "__main__":
    input_size = 50     # vocab size
    hidden_size = 32
    seq_len = 8

    key = jax.random.PRNGKey(0)
    k_params, k_tokens = jax.random.split(key)
    params = init_params(k_params, input_size, hidden_size)
    word_inputs = jax.random.randint(k_tokens, (seq_len,), 0, input_size, jnp.int32)

    # One-time constant fusion (would be done at model-load time in practice).
    fused = prepare_encoder_params(params, hidden_size, use_bf16_recurrent=False)
    fused = jax.tree_util.tree_map(jax.block_until_ready, fused)

    out, bridge_h, bridge_c = encoder_rnn_forward(word_inputs, fused, hidden_size)
    out = jax.block_until_ready(out)
    bridge_h = jax.block_until_ready(bridge_h)
    bridge_c = jax.block_until_ready(bridge_c)

    assert out.shape == (seq_len, 1, 2 * hidden_size)
    assert bridge_h.shape == (1, 1, hidden_size)
    assert bridge_c.shape == (1, 1, hidden_size)

    ref_out, ref_h, ref_c = encoder_rnn_reference(word_inputs, params, hidden_size)
    np.testing.assert_allclose(np.asarray(out), np.asarray(ref_out), atol=1e-5, rtol=1e-5)
    np.testing.assert_allclose(np.asarray(bridge_h), np.asarray(ref_h), atol=1e-5, rtol=1e-5)
    np.testing.assert_allclose(np.asarray(bridge_c), np.asarray(ref_c), atol=1e-5, rtol=1e-5)

    print("KERNEL_OK")
</pallas_src>

<mosaic_0001>
module attributes {stable_mosaic.version = 11 : i64} {
  func.func @_bilstm_kernel(%arg0: memref<8x256xf32, #tpu.memory_space<vmem>>, %arg1: memref<64x256xf32, #tpu.memory_space<vmem>>, %arg2: memref<8x64xf32, #tpu.memory_space<vmem>>, %arg3: memref<1x32xf32, #tpu.memory_space<vmem>>, %arg4: memref<1x32xf32, #tpu.memory_space<vmem>>) attributes {dimension_semantics = [], scalar_prefetch = 0 : i64, scratch_operands = 0 : i64, tpu.core_type = #tpu.core_type<tc>} {
    %c0 = arith.constant 0 : index
    %c0_0 = arith.constant 0 : index
    %0 = vector.load %arg1[%c0, %c0_0] : memref<64x256xf32, #tpu.memory_space<vmem>>, vector<64x256xf32>
    %1 = tpu.iota {dimensions = array<i32: 1>} : vector<1x256xi32>
    %c192_i32 = arith.constant 192 : i32
    %2 = vector.broadcast %c192_i32 : i32 to vector<1x256xi32>
    %3 = arith.cmpi sge, %1, %2 : vector<1x256xi32>
    %cst = arith.constant 0.000000e+00 : f32
    %4 = vector.broadcast %cst : f32 to vector<1x64xf32>
    %cst_1 = arith.constant 0.000000e+00 : f32
    %5 = vector.broadcast %cst_1 : f32 to vector<1x64xf32>
    %c0_i32 = arith.constant 0 : i32
    %6 = arith.index_cast %c0_i32 : i32 to index
    %c0_2 = arith.constant 0 : index
    %7 = vector.load %arg0[%6, %c0_2] : memref<8x256xf32, #tpu.memory_space<vmem>>, vector<1x256xf32>
    %cst_3 = arith.constant dense<0.000000e+00> : vector<1x256xf32>
    %8 = tpu.matmul %4, %0, %cst_3 {dimension_numbers = #tpu.dot_dimension_numbers<[1], [0], [0], [1], [0, 0, 1, 1], [], []>} : vector<1x64xf32>, vector<64x256xf32>, vector<1x256xf32> -> vector<1x256xf32>
    %9 = arith.addf %8, %7 : vector<1x256xf32>
    %10 = arith.negf %9 : vector<1x256xf32>
    %11 = math.exp %10 : vector<1x256xf32>
    %cst_4 = arith.constant 1.000000e+00 : f32
    %12 = vector.broadcast %cst_4 : f32 to vector<1x256xf32>
    %13 = arith.addf %12, %11 : vector<1x256xf32>
    %14 = arith.divf %12, %13 : vector<1x256xf32>
    %cst_5 = arith.constant 2.000000e+00 : f32
    %15 = vector.broadcast %cst_5 : f32 to vector<1x256xf32>
    %16 = arith.mulf %15, %14 : vector<1x256xf32>
    %cst_6 = arith.constant 1.000000e+00 : f32
    %17 = vector.broadcast %cst_6 : f32 to vector<1x256xf32>
    %18 = arith.subf %16, %17 : vector<1x256xf32>
    %19 = arith.select %3, %18, %14 : vector<1x256xi1>, vector<1x256xf32>
    %20 = vector.extract_strided_slice %19 {offsets = [0, 0], sizes = [1, 64], strides = [1, 1]} : vector<1x256xf32> to vector<1x64xf32>
    %21 = vector.extract_strided_slice %19 {offsets = [0, 64], sizes = [1, 64], strides = [1, 1]} : vector<1x256xf32> to vector<1x64xf32>
    %22 = vector.extract_strided_slice %19 {offsets = [0, 128], sizes = [1, 64], strides = [1, 1]} : vector<1x256xf32> to vector<1x64xf32>
    %23 = vector.extract_strided_slice %19 {offsets = [0, 192], sizes = [1, 64], strides = [1, 1]} : vector<1x256xf32> to vector<1x64xf32>
    %24 = arith.mulf %20, %5 : vector<1x64xf32>
    %25 = arith.mulf %21, %23 : vector<1x64xf32>
    %26 = arith.addf %24, %25 : vector<1x64xf32>
    %27 = math.tanh %26 : vector<1x64xf32>
    %28 = arith.mulf %22, %27 : vector<1x64xf32>
    %29 = arith.index_cast %c0_i32 : i32 to index
    %c0_7 = arith.constant 0 : index
    %30 = vector.load %arg2[%29, %c0_7] : memref<8x64xf32, #tpu.memory_space<vmem>>, vector<1x64xf32>
    tpu.vector_store %arg2[%29, %c0_7], %28 {strides = array<i32>} : memref<8x64xf32, #tpu.memory_space<vmem>>, vector<1x64xf32>,
    %c1_i32 = arith.constant 1 : i32
    %31 = arith.index_cast %c1_i32 : i32 to index
    %c0_8 = arith.constant 0 : index
    %32 = vector.load %arg0[%31, %c0_8] : memref<8x256xf32, #tpu.memory_space<vmem>>, vector<1x256xf32>
    %cst_9 = arith.constant dense<0.000000e+00> : vector<1x256xf32>
    %33 = tpu.matmul %28, %0, %cst_9 {dimension_numbers = #tpu.dot_dimension_numbers<[1], [0], [0], [1], [0, 0, 1, 1], [], []>} : vector<1x64xf32>, vector<64x256xf32>, vector<1x256xf32> -> vector<1x256xf32>
    %34 = arith.addf %33, %32 : vector<1x256xf32>
    %35 = arith.negf %34 : vector<1x256xf32>
    %36 = math.exp %35 : vector<1x256xf32>
    %cst_10 = arith.constant 1.000000e+00 : f32
    %37 = vector.broadcast %cst_10 : f32 to vector<1x256xf32>
    %38 = arith.addf %37, %36 : vector<1x256xf32>
    %39 = arith.divf %37, %38 : vector<1x256xf32>
    %cst_11 = arith.constant 2.000000e+00 : f32
    %40 = vector.broadcast %cst_11 : f32 to vector<1x256xf32>
    %41 = arith.mulf %40, %39 : vector<1x256xf32>
    %cst_12 = arith.constant 1.000000e+00 : f32
    %42 = vector.broadcast %cst_12 : f32 to vector<1x256xf32>
    %43 = arith.subf %41, %42 : vector<1x256xf32>
    %44 = arith.select %3, %43, %39 : vector<1x256xi1>, vector<1x256xf32>
    %45 = vector.extract_strided_slice %44 {offsets = [0, 0], sizes = [1, 64], strides = [1, 1]} : vector<1x256xf32> to vector<1x64xf32>
    %46 = vector.extract_strided_slice %44 {offsets = [0, 64], sizes = [1, 64], strides = [1, 1]} : vector<1x256xf32> to vector<1x64xf32>
    %47 = vector.extract_strided_slice %44 {offsets = [0, 128], sizes = [1, 64], strides = [1, 1]} : vector<1x256xf32> to vector<1x64xf32>
    %48 = vector.extract_strided_slice %44 {offsets = [0, 192], sizes = [1, 64], strides = [1, 1]} : vector<1x256xf32> to vector<1x64xf32>
    %49 = arith.mulf %45, %26 : vector<1x64xf32>
    %50 = arith.mulf %46, %48 : vector<1x64xf32>
    %51 = arith.addf %49, %50 : vector<1x64xf32>
    %52 = math.tanh %51 : vector<1x64xf32>
    %53 = arith.mulf %47, %52 : vector<1x64xf32>
    %54 = arith.index_cast %c1_i32 : i32 to index
    %c0_13 = arith.constant 0 : index
    %55 = vector.load %arg2[%54, %c0_13] : memref<8x64xf32, #tpu.memory_space<vmem>>, vector<1x64xf32>
    tpu.vector_store %arg2[%54, %c0_13], %53 {strides = array<i32>} : memref<8x64xf32, #tpu.memory_space<vmem>>, vector<1x64xf32>,
    %c2_i32 = arith.constant 2 : i32
    %56 = arith.index_cast %c2_i32 : i32 to index
    %c0_14 = arith.constant 0 : index
    %57 = vector.load %arg0[%56, %c0_14] : memref<8x256xf32, #tpu.memory_space<vmem>>, vector<1x256xf32>
    %cst_15 = arith.constant dense<0.000000e+00> : vector<1x256xf32>
    %58 = tpu.matmul %53, %0, %cst_15 {dimension_numbers = #tpu.dot_dimension_numbers<[1], [0], [0], [1], [0, 0, 1, 1], [], []>} : vector<1x64xf32>, vector<64x256xf32>, vector<1x256xf32> -> vector<1x256xf32>
    %59 = arith.addf %58, %57 : vector<1x256xf32>
    %60 = arith.negf %59 : vector<1x256xf32>
    %61 = math.exp %60 : vector<1x256xf32>
    %cst_16 = arith.constant 1.000000e+00 : f32
    %62 = vector.broadcast %cst_16 : f32 to vector<1x256xf32>
    %63 = arith.addf %62, %61 : vector<1x256xf32>
    %64 = arith.divf %62, %63 : vector<1x256xf32>
    %cst_17 = arith.constant 2.000000e+00 : f32
    %65 = vector.broadcast %cst_17 : f32 to vector<1x256xf32>
    %66 = arith.mulf %65, %64 : vector<1x256xf32>
    %cst_18 = arith.constant 1.000000e+00 : f32
    %67 = vector.broadcast %cst_18 : f32 to vector<1x256xf32>
    %68 = arith.subf %66, %67 : vector<1x256xf32>
    %69 = arith.select %3, %68, %64 : vector<1x256xi1>, vector<1x256xf32>
    %70 = vector.extract_strided_slice %69 {offsets = [0, 0], sizes = [1, 64], strides = [1, 1]} : vector<1x256xf32> to vector<1x64xf32>
    %71 = vector.extract_strided_slice %69 {offsets = [0, 64], sizes = [1, 64], strides = [1, 1]} : vector<1x256xf32> to vector<1x64xf32>
    %72 = vector.extract_strided_slice %69 {offsets = [0, 128], sizes = [1, 64], strides = [1, 1]} : vector<1x256xf32> to vector<1x64xf32>
    %73 = vector.extract_strided_slice %69 {offsets = [0, 192], sizes = [1, 64], strides = [1, 1]} : vector<1x256xf32> to vector<1x64xf32>
    %74 = arith.mulf %70, %51 : vector<1x64xf32>
    %75 = arith.mulf %71, %73 : vector<1x64xf32>
    %76 = arith.addf %74, %75 : vector<1x64xf32>
    %77 = math.tanh %76 : vector<1x64xf32>
    %78 = arith.mulf %72, %77 : vector<1x64xf32>
    %79 = arith.index_cast %c2_i32 : i32 to index
    %c0_19 = arith.constant 0 : index
    %80 = vector.load %arg2[%79, %c0_19] : memref<8x64xf32, #tpu.memory_space<vmem>>, vector<1x64xf32>
    tpu.vector_store %arg2[%79, %c0_19], %78 {strides = array<i32>} : memref<8x64xf32, #tpu.memory_space<vmem>>, vector<1x64xf32>,
    %c3_i32 = arith.constant 3 : i32
    %81 = arith.index_cast %c3_i32 : i32 to index
    %c0_20 = arith.constant 0 : index
    %82 = vector.load %arg0[%81, %c0_20] : memref<8x256xf32, #tpu.memory_space<vmem>>, vector<1x256xf32>
    %cst_21 = arith.constant dense<0.000000e+00> : vector<1x256xf32>
    %83 = tpu.matmul %78, %0, %cst_21 {dimension_numbers = #tpu.dot_dimension_numbers<[1], [0], [0], [1], [0, 0, 1, 1], [], []>} : vector<1x64xf32>, vector<64x256xf32>, vector<1x256xf32> -> vector<1x256xf32>
    %84 = arith.addf %83, %82 : vector<1x256xf32>
    %85 = arith.negf %84 : vector<1x256xf32>
    %86 = math.exp %85 : vector<1x256xf32>
    %cst_22 = arith.constant 1.000000e+00 : f32
    %87 = vector.broadcast %cst_22 : f32 to vector<1x256xf32>
    %88 = arith.addf %87, %86 : vector<1x256xf32>
    %89 = arith.divf %87, %88 : vector<1x256xf32>
    %cst_23 = arith.constant 2.000000e+00 : f32
    %90 = vector.broadcast %cst_23 : f32 to vector<1x256xf32>
    %91 = arith.mulf %90, %89 : vector<1x256xf32>
    %cst_24 = arith.constant 1.000000e+00 : f32
    %92 = vector.broadcast %cst_24 : f32 to vector<1x256xf32>
    %93 = arith.subf %91, %92 : vector<1x256xf32>
    %94 = arith.select %3, %93, %89 : vector<1x256xi1>, vector<1x256xf32>
    %95 = vector.extract_strided_slice %94 {offsets = [0, 0], sizes = [1, 64], strides = [1, 1]} : vector<1x256xf32> to vector<1x64xf32>
    %96 = vector.extract_strided_slice %94 {offsets = [0, 64], sizes = [1, 64], strides = [1, 1]} : vector<1x256xf32> to vector<1x64xf32>
    %97 = vector.extract_strided_slice %94 {offsets = [0, 128], sizes = [1, 64], strides = [1, 1]} : vector<1x256xf32> to vector<1x64xf32>
    %98 = vector.extract_strided_slice %94 {offsets = [0, 192], sizes = [1, 64], strides = [1, 1]} : vector<1x256xf32> to vector<1x64xf32>
    %99 = arith.mulf %95, %76 : vector<1x64xf32>
    %100 = arith.mulf %96, %98 : vector<1x64xf32>
    %101 = arith.addf %99, %100 : vector<1x64xf32>
    %102 = math.tanh %101 : vector<1x64xf32>
    %103 = arith.mulf %97, %102 : vector<1x64xf32>
    %104 = arith.index_cast %c3_i32 : i32 to index
    %c0_25 = arith.constant 0 : index
    %105 = vector.load %arg2[%104, %c0_25] : memref<8x64xf32, #tpu.memory_space<vmem>>, vector<1x64xf32>
    tpu.vector_store %arg2[%104, %c0_25], %103 {strides = array<i32>} : memref<8x64xf32, #tpu.memory_space<vmem>>, vector<1x64xf32>,
    %c4_i32 = arith.constant 4 : i32
    %106 = arith.index_cast %c4_i32 : i32 to index
    %c0_26 = arith.constant 0 : index
    %107 = vector.load %arg0[%106, %c0_26] : memref<8x256xf32, #tpu.memory_space<vmem>>, vector<1x256xf32>
    %cst_27 = arith.constant dense<0.000000e+00> : vector<1x256xf32>
    %108 = tpu.matmul %103, %0, %cst_27 {dimension_numbers = #tpu.dot_dimension_numbers<[1], [0], [0], [1], [0, 0, 1, 1], [], []>} : vector<1x64xf32>, vector<64x256xf32>, vector<1x256xf32> -> vector<1x256xf32>
    %109 = arith.addf %108, %107 : vector<1x256xf32>
    %110 = arith.negf %109 : vector<1x256xf32>
    %111 = math.exp %110 : vector<1x256xf32>
    %cst_28 = arith.constant 1.000000e+00 : f32
    %112 = vector.broadcast %cst_28 : f32 to vector<1x256xf32>
    %113 = arith.addf %112, %111 : vector<1x256xf32>
    %114 = arith.divf %112, %113 : vector<1x256xf32>
    %cst_29 = arith.constant 2.000000e+00 : f32
    %115 = vector.broadcast %cst_29 : f32 to vector<1x256xf32>
    %116 = arith.mulf %115, %114 : vector<1x256xf32>
    %cst_30 = arith.constant 1.000000e+00 : f32
    %117 = vector.broadcast %cst_30 : f32 to vector<1x256xf32>
    %118 = arith.subf %116, %117 : vector<1x256xf32>
    %119 = arith.select %3, %118, %114 : vector<1x256xi1>, vector<1x256xf32>
    %120 = vector.extract_strided_slice %119 {offsets = [0, 0], sizes = [1, 64], strides = [1, 1]} : vector<1x256xf32> to vector<1x64xf32>
    %121 = vector.extract_strided_slice %119 {offsets = [0, 64], sizes = [1, 64], strides = [1, 1]} : vector<1x256xf32> to vector<1x64xf32>
    %122 = vector.extract_strided_slice %119 {offsets = [0, 128], sizes = [1, 64], strides = [1, 1]} : vector<1x256xf32> to vector<1x64xf32>
    %123 = vector.extract_strided_slice %119 {offsets = [0, 192], sizes = [1, 64], strides = [1, 1]} : vector<1x256xf32> to vector<1x64xf32>
    %124 = arith.mulf %120, %101 : vector<1x64xf32>
    %125 = arith.mulf %121, %123 : vector<1x64xf32>
    %126 = arith.addf %124, %125 : vector<1x64xf32>
    %127 = math.tanh %126 : vector<1x64xf32>
    %128 = arith.mulf %122, %127 : vector<1x64xf32>
    %129 = arith.index_cast %c4_i32 : i32 to index
    %c0_31 = arith.constant 0 : index
    %130 = vector.load %arg2[%129, %c0_31] : memref<8x64xf32, #tpu.memory_space<vmem>>, vector<1x64xf32>
    tpu.vector_store %arg2[%129, %c0_31], %128 {strides = array<i32>} : memref<8x64xf32, #tpu.memory_space<vmem>>, vector<1x64xf32>,
    %c5_i32 = arith.constant 5 : i32
    %131 = arith.index_cast %c5_i32 : i32 to index
    %c0_32 = arith.constant 0 : index
    %132 = vector.load %arg0[%131, %c0_32] : memref<8x256xf32, #tpu.memory_space<vmem>>, vector<1x256xf32>
    %cst_33 = arith.constant dense<0.000000e+00> : vector<1x256xf32>
    %133 = tpu.matmul %128, %0, %cst_33 {dimension_numbers = #tpu.dot_dimension_numbers<[1], [0], [0], [1], [0, 0, 1, 1], [], []>} : vector<1x64xf32>, vector<64x256xf32>, vector<1x256xf32> -> vector<1x256xf32>
    %134 = arith.addf %133, %132 : vector<1x256xf32>
    %135 = arith.negf %134 : vector<1x256xf32>
    %136 = math.exp %135 : vector<1x256xf32>
    %cst_34 = arith.constant 1.000000e+00 : f32
    %137 = vector.broadcast %cst_34 : f32 to vector<1x256xf32>
    %138 = arith.addf %137, %136 : vector<1x256xf32>
    %139 = arith.divf %137, %138 : vector<1x256xf32>
    %cst_35 = arith.constant 2.000000e+00 : f32
    %140 = vector.broadcast %cst_35 : f32 to vector<1x256xf32>
    %141 = arith.mulf %140, %139 : vector<1x256xf32>
    %cst_36 = arith.constant 1.000000e+00 : f32
    %142 = vector.broadcast %cst_36 : f32 to vector<1x256xf32>
    %143 = arith.subf %141, %142 : vector<1x256xf32>
    %144 = arith.select %3, %143, %139 : vector<1x256xi1>, vector<1x256xf32>
    %145 = vector.extract_strided_slice %144 {offsets = [0, 0], sizes = [1, 64], strides = [1, 1]} : vector<1x256xf32> to vector<1x64xf32>
    %146 = vector.extract_strided_slice %144 {offsets = [0, 64], sizes = [1, 64], strides = [1, 1]} : vector<1x256xf32> to vector<1x64xf32>
    %147 = vector.extract_strided_slice %144 {offsets = [0, 128], sizes = [1, 64], strides = [1, 1]} : vector<1x256xf32> to vector<1x64xf32>
    %148 = vector.extract_strided_slice %144 {offsets = [0, 192], sizes = [1, 64], strides = [1, 1]} : vector<1x256xf32> to vector<1x64xf32>
    %149 = arith.mulf %145, %126 : vector<1x64xf32>
    %150 = arith.mulf %146, %148 : vector<1x64xf32>
    %151 = arith.addf %149, %150 : vector<1x64xf32>
    %152 = math.tanh %151 : vector<1x64xf32>
    %153 = arith.mulf %147, %152 : vector<1x64xf32>
    %154 = arith.index_cast %c5_i32 : i32 to index
    %c0_37 = arith.constant 0 : index
    %155 = vector.load %arg2[%154, %c0_37] : memref<8x64xf32, #tpu.memory_space<vmem>>, vector<1x64xf32>
    tpu.vector_store %arg2[%154, %c0_37], %153 {strides = array<i32>} : memref<8x64xf32, #tpu.memory_space<vmem>>, vector<1x64xf32>,
    %c6_i32 = arith.constant 6 : i32
    %156 = arith.index_cast %c6_i32 : i32 to index
    %c0_38 = arith.constant 0 : index
    %157 = vector.load %arg0[%156, %c0_38] : memref<8x256xf32, #tpu.memory_space<vmem>>, vector<1x256xf32>
    %cst_39 = arith.constant dense<0.000000e+00> : vector<1x256xf32>
    %158 = tpu.matmul %153, %0, %cst_39 {dimension_numbers = #tpu.dot_dimension_numbers<[1], [0], [0], [1], [0, 0, 1, 1], [], []>} : vector<1x64xf32>, vector<64x256xf32>, vector<1x256xf32> -> vector<1x256xf32>
    %159 = arith.addf %158, %157 : vector<1x256xf32>
    %160 = arith.negf %159 : vector<1x256xf32>
    %161 = math.exp %160 : vector<1x256xf32>
    %cst_40 = arith.constant 1.000000e+00 : f32
    %162 = vector.broadcast %cst_40 : f32 to vector<1x256xf32>
    %163 = arith.addf %162, %161 : vector<1x256xf32>
    %164 = arith.divf %162, %163 : vector<1x256xf32>
    %cst_41 = arith.constant 2.000000e+00 : f32
    %165 = vector.broadcast %cst_41 : f32 to vector<1x256xf32>
    %166 = arith.mulf %165, %164 : vector<1x256xf32>
    %cst_42 = arith.constant 1.000000e+00 : f32
    %167 = vector.broadcast %cst_42 : f32 to vector<1x256xf32>
    %168 = arith.subf %166, %167 : vector<1x256xf32>
    %169 = arith.select %3, %168, %164 : vector<1x256xi1>, vector<1x256xf32>
    %170 = vector.extract_strided_slice %169 {offsets = [0, 0], sizes = [1, 64], strides = [1, 1]} : vector<1x256xf32> to vector<1x64xf32>
    %171 = vector.extract_strided_slice %169 {offsets = [0, 64], sizes = [1, 64], strides = [1, 1]} : vector<1x256xf32> to vector<1x64xf32>
    %172 = vector.extract_strided_slice %169 {offsets = [0, 128], sizes = [1, 64], strides = [1, 1]} : vector<1x256xf32> to vector<1x64xf32>
    %173 = vector.extract_strided_slice %169 {offsets = [0, 192], sizes = [1, 64], strides = [1, 1]} : vector<1x256xf32> to vector<1x64xf32>
    %174 = arith.mulf %170, %151 : vector<1x64xf32>
    %175 = arith.mulf %171, %173 : vector<1x64xf32>
    %176 = arith.addf %174, %175 : vector<1x64xf32>
    %177 = math.tanh %176 : vector<1x64xf32>
    %178 = arith.mulf %172, %177 : vector<1x64xf32>
    %179 = arith.index_cast %c6_i32 : i32 to index
    %c0_43 = arith.constant 0 : index
    %180 = vector.load %arg2[%179, %c0_43] : memref<8x64xf32, #tpu.memory_space<vmem>>, vector<1x64xf32>
    tpu.vector_store %arg2[%179, %c0_43], %178 {strides = array<i32>} : memref<8x64xf32, #tpu.memory_space<vmem>>, vector<1x64xf32>,
    %c7_i32 = arith.constant 7 : i32
    %181 = arith.index_cast %c7_i32 : i32 to index
    %c0_44 = arith.constant 0 : index
    %182 = vector.load %arg0[%181, %c0_44] : memref<8x256xf32, #tpu.memory_space<vmem>>, vector<1x256xf32>
    %cst_45 = arith.constant dense<0.000000e+00> : vector<1x256xf32>
    %183 = tpu.matmul %178, %0, %cst_45 {dimension_numbers = #tpu.dot_dimension_numbers<[1], [0], [0], [1], [0, 0, 1, 1], [], []>} : vector<1x64xf32>, vector<64x256xf32>, vector<1x256xf32> -> vector<1x256xf32>
    %184 = arith.addf %183, %182 : vector<1x256xf32>
    %185 = arith.negf %184 : vector<1x256xf32>
    %186 = math.exp %185 : vector<1x256xf32>
    %cst_46 = arith.constant 1.000000e+00 : f32
    %187 = vector.broadcast %cst_46 : f32 to vector<1x256xf32>
    %188 = arith.addf %187, %186 : vector<1x256xf32>
    %189 = arith.divf %187, %188 : vector<1x256xf32>
    %cst_47 = arith.constant 2.000000e+00 : f32
    %190 = vector.broadcast %cst_47 : f32 to vector<1x256xf32>
    %191 = arith.mulf %190, %189 : vector<1x256xf32>
    %cst_48 = arith.constant 1.000000e+00 : f32
    %192 = vector.broadcast %cst_48 : f32 to vector<1x256xf32>
    %193 = arith.subf %191, %192 : vector<1x256xf32>
    %194 = arith.select %3, %193, %189 : vector<1x256xi1>, vector<1x256xf32>
    %195 = vector.extract_strided_slice %194 {offsets = [0, 0], sizes = [1, 64], strides = [1, 1]} : vector<1x256xf32> to vector<1x64xf32>
    %196 = vector.extract_strided_slice %194 {offsets = [0, 64], sizes = [1, 64], strides = [1, 1]} : vector<1x256xf32> to vector<1x64xf32>
    %197 = vector.extract_strided_slice %194 {offsets = [0, 128], sizes = [1, 64], strides = [1, 1]} : vector<1x256xf32> to vector<1x64xf32>
    %198 = vector.extract_strided_slice %194 {offsets = [0, 192], sizes = [1, 64], strides = [1, 1]} : vector<1x256xf32> to vector<1x64xf32>
    %199 = arith.mulf %195, %176 : vector<1x64xf32>
    %200 = arith.mulf %196, %198 : vector<1x64xf32>
    %201 = arith.addf %199, %200 : vector<1x64xf32>
    %202 = math.tanh %201 : vector<1x64xf32>
    %203 = arith.mulf %197, %202 : vector<1x64xf32>
    %204 = arith.index_cast %c7_i32 : i32 to index
    %c0_49 = arith.constant 0 : index
    %205 = vector.load %arg2[%204, %c0_49] : memref<8x64xf32, #tpu.memory_space<vmem>>, vector<1x64xf32>
    tpu.vector_store %arg2[%204, %c0_49], %203 {strides = array<i32>} : memref<8x64xf32, #tpu.memory_space<vmem>>, vector<1x64xf32>,
    %c8_i32 = arith.constant 8 : i32
    %206 = vector.extract_strided_slice %203 {offsets = [0, 32], sizes = [1, 32], strides = [1, 1]} : vector<1x64xf32> to vector<1x32xf32>
    %c0_50 = arith.constant 0 : index
    %c0_51 = arith.constant 0 : index
    %207 = vector.load %arg3[%c0_50, %c0_51] : memref<1x32xf32, #tpu.memory_space<vmem>>, vector<1x32xf32>
    tpu.vector_store %arg3[%c0_50, %c0_51], %206 {strides = array<i32>} : memref<1x32xf32, #tpu.memory_space<vmem>>, vector<1x32xf32>,
    %208 = vector.extract_strided_slice %201 {offsets = [0, 32], sizes = [1, 32], strides = [1, 1]} : vector<1x64xf32> to vector<1x32xf32>
    %c0_52 = arith.constant 0 : index
    %c0_53 = arith.constant 0 : index
    %209 = vector.load %arg4[%c0_52, %c0_53] : memref<1x32xf32, #tpu.memory_space<vmem>>, vector<1x32xf32>
    tpu.vector_store %arg4[%c0_52, %c0_53], %208 {strides = array<i32>} : memref<1x32xf32, #tpu.memory_space<vmem>>, vector<1x32xf32>,
    return
  }
}

</mosaic_0001>

<llo_original>
// kernel: tpu_custom_call.1
$region0: #{tpu_custom_call.1}
  #allocation0 [shape = 'u32[]', space=smem, size = 0x4, offset = 0x4, fixed_abs, tag = 'smem constant byte address 0x4 - core index']
  #allocation1 [shape = 'u32[72,128]{1,0:T(1,128)}', space=vmem, size = 0x9000, scoped, tag = 'internal scratch']
  %s0 = inlined_call_operand.hbm [shape: f32[8,256], index: 0, kind: input, shape index: {}]
  %s1 = inlined_call_operand.hbm [shape: f32[64,256], index: 1, kind: input, shape index: {}]
  %s2 = inlined_call_operand.hbm [shape: f32[8,64], index: 2, kind: output, shape index: {0}]
  %s3 = inlined_call_operand.hbm [shape: f32[1,32], index: 3, kind: output, shape index: {1}]
  %s4 = inlined_call_operand.hbm [shape: f32[1,32], index: 4, kind: output, shape index: {2}]
  %5 = xla_tuple %s2, %s3, %s4
  %s6 = sld [smem:[#allocation0]]
  $region42: #{tpu_custom_call.1} parent=0
    _
  %s8 = ssub.s32 1, %s6
  %s9 = scalar_select 0, %s8, %s6
  $region1: #{tpu_custom_call.1} parent=0
    #allocation2 [shape = 'u8[8192]{0}', space=vmem, size = 0x2000, scoped, tag = 'input window, operand 0, single buffered']
    #allocation3 [shape = 's32[1]{0}', space=sflag, size = 0x4, scoped, tag = 'scoped memory for tpu_custom_call.1']
    #allocation4 [shape = 's32[1]{0}', space=sflag, size = 0x4, scoped, tag = 'scoped memory for tpu_custom_call.1']
    #allocation5 [shape = 'u8[65536]{0}', space=vmem, size = 0x10000, scoped, tag = 'input window, operand 1, single buffered']
    #allocation6 [shape = 's32[1]{0}', space=sflag, size = 0x4, scoped, tag = 'scoped memory for tpu_custom_call.1']
    #allocation7 [shape = 'u8[4096]{0}', space=vmem, size = 0x1000, scoped, tag = 'output window, operand 0, single buffered']
    #allocation8 [shape = 'u8[512]{0}', space=vmem, size = 0x400, scoped, tag = 'output window, operand 1, single buffered']
    #allocation9 [shape = 's32[1]{0}', space=sflag, size = 0x4, scoped, tag = 'scoped memory for tpu_custom_call.1']
    #allocation10 [shape = 'u8[512]{0}', space=vmem, size = 0x400, scoped, tag = 'output window, operand 2, single buffered']
    %10 = vsyncpa [#allocation3], 0
    %11 = vsyncpa [#allocation6], 0
    %12 = vsyncpa [#allocation4], 0
    %13 = vsyncpa [#allocation9], 0
    // Predicated region
    $region2: #{tpu_custom_call.1} parent=1 // pred_check
      _
    $region3: #{tpu_custom_call.1} parent=1 // pred_check_branch
      %15 = sbr.rel (0) target = $region5
    $region4: #{tpu_custom_call.1} parent=1 // pred_region
      %17 = vsyncadd [#allocation3], 0
      %s19 = sshll.u32 %s0, 4
      %s20 = int_to_ptr.hbm [resolvable:$true] %s19
      %s21 = sshll.u32 [#allocation2], 4
      %s22 = int_to_ptr.vmem [resolvable:$true] %s21
      %24 = dma.hbm_to_vmem [thread:$0]  %s20, 256, %s22, [#allocation3]
    $region5: #{tpu_custom_call.1} parent=1 // pred_fallthru
      _
    // Predicated region
    $region6: #{tpu_custom_call.1} parent=1 // pred_check
      _
    $region7: #{tpu_custom_call.1} parent=1 // pred_check_branch
      %26 = sbr.rel (0) target = $region9
    $region8: #{tpu_custom_call.1} parent=1 // pred_region
      %28 = vsyncadd [#allocation6], 0
      %s29 = sshll.u32 %s1, 4
      %s30 = int_to_ptr.hbm [resolvable:$true] %s29
      %s31 = sshll.u32 [#allocation5], 4
      %s32 = int_to_ptr.vmem [resolvable:$true] %s31
      %37 = dma.hbm_to_vmem [thread:$0]  %s30, 2048, %s32, [#allocation6], 256, 256, 16
    $region9: #{tpu_custom_call.1} parent=1 // pred_fallthru
      _
    // Predicated region
    $region10: #{tpu_custom_call.1} parent=1 // pred_check
      _
    $region11: #{tpu_custom_call.1} parent=1 // pred_check_branch
      %39 = sbr.rel (0) target = $region13
    $region12: #{tpu_custom_call.1} parent=1 // pred_region
      %41 = dma.done [#allocation3], 256
    $region13: #{tpu_custom_call.1} parent=1 // pred_fallthru
      _
    // Predicated region
    $region14: #{tpu_custom_call.1} parent=1 // pred_check
      _
    $region15: #{tpu_custom_call.1} parent=1 // pred_check_branch
      %43 = sbr.rel (0) target = $region17
    $region16: #{tpu_custom_call.1} parent=1 // pred_region
      %45 = dma.done [#allocation6], 2048
    $region17: #{tpu_custom_call.1} parent=1 // pred_fallthru
      _
    %v46 = vld [vmem:[#allocation5] sm:$0xff]
    %v47 = vld [vmem:[#allocation5 + $0x8] sm:$0xff]
    %v48 = vld [vmem:[#allocation5 + $0x10] sm:$0xff]
    %v49 = vld [vmem:[#allocation5 + $0x18] sm:$0xff]
    %v50 = vld [vmem:[#allocation5 + $0x20] sm:$0xff]
    %v51 = vld [vmem:[#allocation5 + $0x28] sm:$0xff]
    %v52 = vld [vmem:[#allocation5 + $0x30] sm:$0xff]
    %v53 = vld [vmem:[#allocation5 + $0x38] sm:$0xff]
    %v54 = vld [vmem:[#allocation5 + $0x40] sm:$0xff]
    %v55 = vld [vmem:[#allocation5 + $0x48] sm:$0xff]
    %v56 = vld [vmem:[#allocation5 + $0x50] sm:$0xff]
    %v57 = vld [vmem:[#allocation5 + $0x58] sm:$0xff]
    %v58 = vld [vmem:[#allocation5 + $0x60] sm:$0xff]
    %v59 = vld [vmem:[#allocation5 + $0x68] sm:$0xff]
    %v60 = vld [vmem:[#allocation5 + $0x70] sm:$0xff]
    %v61 = vld [vmem:[#allocation5 + $0x78] sm:$0xff]
    %v62 = vlaneseq
    %v63 = vand.u32 %v62, 127
    %v64 = vadd.s32 %v63, 128
    %vm65 = vcmp.ge.s32.totalorder %v63, 192
    %vm66 = vcmp.ge.s32.totalorder %v64, 192
    %v67 = vld [vmem:[#allocation2] ss:$8 sm:$0x3]
    %v69 = vperm.slane %v67, 0
    %v70 = vperm.slane %v67, 1
    %vm73 = vcmask 523264
    %v75 = vsel %vm73, 0.0, 0
    %77 = vmatpush.msra.mxu0 0.0
    %78 = vmatpush.msra.mxu0 0.0
    %79 = vmatpush.msra.mxu0 0.0
    %80 = vmatpush.msra.mxu0 0.0
    %81 = vmatpush.msra.mxu0 0.0
    %82 = vmatpush.msra.mxu0 0.0
    %83 = vmatpush.msra.mxu0 0.0
    %84 = vmatpush.msra.mxu0 0.0
    %85 = vmatpush.msra.mxu0 %v60
    %86 = vmatpush.msra.mxu0 %v58
    %87 = vmatpush.msra.mxu0 %v56
    %88 = vmatpush.msra.mxu0 %v54
    %89 = vmatpush.msra.mxu0 %v52
    %90 = vmatpush.msra.mxu0 %v50
    %91 = vmatpush.msra.mxu0 %v48
    %92 = vmatpush.msra.mxu0 %v46
    %93 = vmatmul.f32.gmra.mxu0 %v75
    %v94 = vpop.f32.mrf.mxu0
    %v95 = vadd.f32 %v69, %v94
    %96 = vdwg.mxu0
    %97 = vmatpush.msra.mxu0 0.0
    %98 = vmatpush.msra.mxu0 0.0
    %99 = vmatpush.msra.mxu0 0.0
    %100 = vmatpush.msra.mxu0 0.0
    %101 = vmatpush.msra.mxu0 0.0
    %102 = vmatpush.msra.mxu0 0.0
    %103 = vmatpush.msra.mxu0 0.0
    %104 = vmatpush.msra.mxu0 0.0
    %105 = vmatpush.msra.mxu0 %v61
    %106 = vmatpush.msra.mxu0 %v59
    %107 = vmatpush.msra.mxu0 %v57
    %108 = vmatpush.msra.mxu0 %v55
    %109 = vmatpush.msra.mxu0 %v53
    %110 = vmatpush.msra.mxu0 %v51
    %111 = vmatpush.msra.mxu0 %v49
    %112 = vmatpush.msra.mxu0 %v47
    %113 = vmatmul.f32.gmra.mxu0 %v75
    %v114 = vpop.f32.mrf.mxu0
    %v115 = vadd.f32 %v70, %v114
    %116 = vdwg.mxu0
    %v117 = vxor.u32 %v95, 2147483648
    %v118 = vxor.u32 %v115, 2147483648
    %v119 = vmul.f32 %v117, 1.442695
    %v120 = vpow.pop %v119
    %v121 = vmul.f32 %v118, 1.442695
    %v122 = vpow.pop %v121
    %v123 = vadd.f32 %v120, 1.0
    %v124 = vadd.f32 %v122, 1.0
    %v125 = vrcp.pop %v123
    %v126 = vmul.f32 %v123, %v125
    %v127 = vsub.f32 1.0, %v126
    %v128 = vmul.f32 %v125, %v127
    %v129 = vadd.f32 %v125, %v128
    %vm130 = vweird.f32 %v123
    %vm131 = vweird.f32 %v125
    %vm132 = vmor %vm130, %vm131
    %v133 = vsel %vm132, %v125, %v129
    %v134 = vand.u32 2147483647, %v123
    %vm135 = vcmp.eq.f32.partialorder %v134, 8.507059e+37
    %v136 = vand.u32 %v123, 2147483648
    %v137 = vor.u32 1.1754944e-38, %v136
    %v138 = vsel %vm135, %v137, %v133
    %v139 = vmul.f32 1.0, %v138
    %v140 = vrcp.pop %v124
    %v141 = vmul.f32 %v124, %v140
    %v142 = vsub.f32 1.0, %v141
    %v143 = vmul.f32 %v140, %v142
    %v144 = vadd.f32 %v140, %v143
    %vm145 = vweird.f32 %v124
    %vm146 = vweird.f32 %v140
    %vm147 = vmor %vm145, %vm146
    %v148 = vsel %vm147, %v140, %v144
    %v149 = vand.u32 2147483647, %v124
    %vm150 = vcmp.eq.f32.partialorder %v149, 8.507059e+37
    %v151 = vand.u32 %v124, 2147483648
    %v152 = vor.u32 1.1754944e-38, %v151
    %v153 = vsel %vm150, %v152, %v148
    %v154 = vmul.f32 1.0, %v153
    %v155 = vmul.f32 %v139, 2.0
    %v156 = vmul.f32 %v154, 2.0
    %v157 = vsub.f32 %v155, 1.0
    %v158 = vsub.f32 %v156, 1.0
    %v159 = vsel %vm65, %v157, %v139
    %v160 = vsel %vm66, %v158, %v154
    %v161 = vmul.f32 %v159, 0.0
    %v162 = vmul.f32 %v159, %v160
    %164 = vrot.lane.b32.xlu0 %v162, 64
    %v165 = vpop.permute.xlu0 %164
    %v167 = vadd.f32 %v161, %v165
    %v168 = vtanh.pop %v167
    %v169 = vmul.f32 %v160, %v168
    %vm170 = vcmask 516096
    %171 = vst.msk [vmem:[#allocation7] sm:$0x1] %vm170, %v169
    %s172 = scalar_lea.vmem [#allocation2], 1
    %v173 = vld [vmem:[%s172] ss:$8 sm:$0x3]
    %v175 = vperm.slane %v173, 0
    %v176 = vperm.slane %v173, 1
    %v180 = vsel %vm73, %v169, 0
    %182 = vmatpush.msra.mxu0 0.0
    %183 = vmatpush.msra.mxu0 0.0
    %184 = vmatpush.msra.mxu0 0.0
    %185 = vmatpush.msra.mxu0 0.0
    %186 = vmatpush.msra.mxu0 0.0
    %187 = vmatpush.msra.mxu0 0.0
    %188 = vmatpush.msra.mxu0 0.0
    %189 = vmatpush.msra.mxu0 0.0
    %190 = vmatpush.msra.mxu0 %v60
    %191 = vmatpush.msra.mxu0 %v58
    %192 = vmatpush.msra.mxu0 %v56
    %193 = vmatpush.msra.mxu0 %v54
    %194 = vmatpush.msra.mxu0 %v52
    %195 = vmatpush.msra.mxu0 %v50
    %196 = vmatpush.msra.mxu0 %v48
    %197 = vmatpush.msra.mxu0 %v46
    %198 = vmatmul.f32.gmra.mxu0 %v180
    %v199 = vpop.f32.mrf.mxu0
    %v200 = vadd.f32 %v175, %v199
    %201 = vdwg.mxu0
    %202 = vmatpush.msra.mxu0 0.0
    %203 = vmatpush.msra.mxu0 0.0
    %204 = vmatpush.msra.mxu0 0.0
    %205 = vmatpush.msra.mxu0 0.0
    %206 = vmatpush.msra.mxu0 0.0
    %207 = vmatpush.msra.mxu0 0.0
    %208 = vmatpush.msra.mxu0 0.0
    %209 = vmatpush.msra.mxu0 0.0
    %210 = vmatpush.msra.mxu0 %v61
    %211 = vmatpush.msra.mxu0 %v59
    %212 = vmatpush.msra.mxu0 %v57
    %213 = vmatpush.msra.mxu0 %v55
    %214 = vmatpush.msra.mxu0 %v53
    %215 = vmatpush.msra.mxu0 %v51
    %216 = vmatpush.msra.mxu0 %v49
    %217 = vmatpush.msra.mxu0 %v47
    %218 = vmatmul.f32.gmra.mxu0 %v180
    %v219 = vpop.f32.mrf.mxu0
    %v220 = vadd.f32 %v176, %v219
    %221 = vdwg.mxu0
    %v222 = vxor.u32 %v200, 2147483648
    %v223 = vxor.u32 %v220, 2147483648
    %v224 = vmul.f32 %v222, 1.442695
    %v225 = vpow.pop %v224
    %v226 = vmul.f32 %v223, 1.442695
    %v227 = vpow.pop %v226
    %v228 = vadd.f32 %v225, 1.0
    %v229 = vadd.f32 %v227, 1.0
    %v230 = vrcp.pop %v228
    %v231 = vmul.f32 %v228, %v230
    %v232 = vsub.f32 1.0, %v231
    %v233 = vmul.f32 %v230, %v232
    %v234 = vadd.f32 %v230, %v233
    %vm235 = vweird.f32 %v228
    %vm236 = vweird.f32 %v230
    %vm237 = vmor %vm235, %vm236
    %v238 = vsel %vm237, %v230, %v234
    %v239 = vand.u32 2147483647, %v228
    %vm240 = vcmp.eq.f32.partialorder %v239, 8.507059e+37
    %v241 = vand.u32 %v228, 2147483648
    %v242 = vor.u32 1.1754944e-38, %v241
    %v243 = vsel %vm240, %v242, %v238
    %v244 = vmul.f32 1.0, %v243
    %v245 = vrcp.pop %v229
    %v246 = vmul.f32 %v229, %v245
    %v247 = vsub.f32 1.0, %v246
    %v248 = vmul.f32 %v245, %v247
    %v249 = vadd.f32 %v245, %v248
    %vm250 = vweird.f32 %v229
    %vm251 = vweird.f32 %v245
    %vm252 = vmor %vm250, %vm251
    %v253 = vsel %vm252, %v245, %v249
    %v254 = vand.u32 2147483647, %v229
    %vm255 = vcmp.eq.f32.partialorder %v254, 8.507059e+37
    %v256 = vand.u32 %v229, 2147483648
    %v257 = vor.u32 1.1754944e-38, %v256
    %v258 = vsel %vm255, %v257, %v253
    %v259 = vmul.f32 1.0, %v258
    %v260 = vmul.f32 %v244, 2.0
    %v261 = vmul.f32 %v259, 2.0
    %v262 = vsub.f32 %v260, 1.0
    %v263 = vsub.f32 %v261, 1.0
    %v264 = vsel %vm65, %v262, %v244
    %v265 = vsel %vm66, %v263, %v259
    %v266 = vmul.f32 %v264, %v167
    %v267 = vmul.f32 %v264, %v265
    %269 = vrot.lane.b32.xlu0 %v267, 64
    %v270 = vpop.permute.xlu0 %269
    %v272 = vadd.f32 %v266, %v270
    %v273 = vtanh.pop %v272
    %v274 = vmul.f32 %v265, %v273
    %275 = vst.msk [vmem:[#allocation7 + $0x1] sm:$0x1] %vm170, %v274
    %s276 = scalar_lea.vmem [#allocation2], 2
    %v277 = vld [vmem:[%s276] ss:$8 sm:$0x3]
    %v279 = vperm.slane %v277, 0
    %v280 = vperm.slane %v277, 1
    %v284 = vsel %vm73, %v274, 0
    %286 = vmatpush.msra.mxu0 0.0
    %287 = vmatpush.msra.mxu0 0.0
    %288 = vmatpush.msra.mxu0 0.0
    %289 = vmatpush.msra.mxu0 0.0
    %290 = vmatpush.msra.mxu0 0.0
    %291 = vmatpush.msra.mxu0 0.0
    %292 = vmatpush.msra.mxu0 0.0
    %293 = vmatpush.msra.mxu0 0.0
    %294 = vmatpush.msra.mxu0 %v60
    %295 = vmatpush.msra.mxu0 %v58
    %296 = vmatpush.msra.mxu0 %v56
    %297 = vmatpush.msra.mxu0 %v54
    %298 = vmatpush.msra.mxu0 %v52
    %299 = vmatpush.msra.mxu0 %v50
    %300 = vmatpush.msra.mxu0 %v48
    %301 = vmatpush.msra.mxu0 %v46
    %302 = vmatmul.f32.gmra.mxu0 %v284
    %v303 = vpop.f32.mrf.mxu0
    %v304 = vadd.f32 %v279, %v303
    %305 = vdwg.mxu0
    %306 = vmatpush.msra.mxu0 0.0
    %307 = vmatpush.msra.mxu0 0.0
    %308 = vmatpush.msra.mxu0 0.0
    %309 = vmatpush.msra.mxu0 0.0
    %310 = vmatpush.msra.mxu0 0.0
    %311 = vmatpush.msra.mxu0 0.0
    %312 = vmatpush.msra.mxu0 0.0
    %313 = vmatpush.msra.mxu0 0.0
    %314 = vmatpush.msra.mxu0 %v61
    %315 = vmatpush.msra.mxu0 %v59
    %316 = vmatpush.msra.mxu0 %v57
    %317 = vmatpush.msra.mxu0 %v55
    %318 = vmatpush.msra.mxu0 %v53
    %319 = vmatpush.msra.mxu0 %v51
    %320 = vmatpush.msra.mxu0 %v49
    %321 = vmatpush.msra.mxu0 %v47
    %322 = vmatmul.f32.gmra.mxu0 %v284
    %v323 = vpop.f32.mrf.mxu0
    %v324 = vadd.f32 %v280, %v323
    %325 = vdwg.mxu0
    %v326 = vxor.u32 %v304, 2147483648
    %v327 = vxor.u32 %v324, 2147483648
    %v328 = vmul.f32 %v326, 1.442695
    %v329 = vpow.pop %v328
    %v330 = vmul.f32 %v327, 1.442695
    %v331 = vpow.pop %v330
    %v332 = vadd.f32 %v329, 1.0
    %v333 = vadd.f32 %v331, 1.0
    %v334 = vrcp.pop %v332
    %v335 = vmul.f32 %v332, %v334
    %v336 = vsub.f32 1.0, %v335
    %v337 = vmul.f32 %v334, %v336
    %v338 = vadd.f32 %v334, %v337
    %vm339 = vweird.f32 %v332
    %vm340 = vweird.f32 %v334
    %vm341 = vmor %vm339, %vm340
    %v342 = vsel %vm341, %v334, %v338
    %v343 = vand.u32 2147483647, %v332
    %vm344 = vcmp.eq.f32.partialorder %v343, 8.507059e+37
    %v345 = vand.u32 %v332, 2147483648
    %v346 = vor.u32 1.1754944e-38, %v345
    %v347 = vsel %vm344, %v346, %v342
    %v348 = vmul.f32 1.0, %v347
    %v349 = vrcp.pop %v333
    %v350 = vmul.f32 %v333, %v349
    %v351 = vsub.f32 1.0, %v350
    %v352 = vmul.f32 %v349, %v351
    %v353 = vadd.f32 %v349, %v352
    %vm354 = vweird.f32 %v333
    %vm355 = vweird.f32 %v349
    %vm356 = vmor %vm354, %vm355
    %v357 = vsel %vm356, %v349, %v353
    %v358 = vand.u32 2147483647, %v333
    %vm359 = vcmp.eq.f32.partialorder %v358, 8.507059e+37
    %v360 = vand.u32 %v333, 2147483648
    %v361 = vor.u32 1.1754944e-38, %v360
    %v362 = vsel %vm359, %v361, %v357
    %v363 = vmul.f32 1.0, %v362
    %v364 = vmul.f32 %v348, 2.0
    %v365 = vmul.f32 %v363, 2.0
    %v366 = vsub.f32 %v364, 1.0
    %v367 = vsub.f32 %v365, 1.0
    %v368 = vsel %vm65, %v366, %v348
    %v369 = vsel %vm66, %v367, %v363
    %v370 = vmul.f32 %v368, %v272
    %v371 = vmul.f32 %v368, %v369
    %373 = vrot.lane.b32.xlu0 %v371, 64
    %v374 = vpop.permute.xlu0 %373
    %v376 = vadd.f32 %v370, %v374
    %v377 = vtanh.pop %v376
    %v378 = vmul.f32 %v369, %v377
    %379 = vst.msk [vmem:[#allocation7 + $0x2] sm:$0x1] %vm170, %v378
    %s380 = scalar_lea.vmem [#allocation2], 3
    %v381 = vld [vmem:[%s380] ss:$8 sm:$0x3]
    %v383 = vperm.slane %v381, 0
    %v384 = vperm.slane %v381, 1
    %v388 = vsel %vm73, %v378, 0
    %390 = vmatpush.msra.mxu0 0.0
    %391 = vmatpush.msra.mxu0 0.0
    %392 = vmatpush.msra.mxu0 0.0
    %393 = vmatpush.msra.mxu0 0.0
    %394 = vmatpush.msra.mxu0 0.0
    %395 = vmatpush.msra.mxu0 0.0
    %396 = vmatpush.msra.mxu0 0.0
    %397 = vmatpush.msra.mxu0 0.0
    %398 = vmatpush.msra.mxu0 %v60
    %399 = vmatpush.msra.mxu0 %v58
    %400 = vmatpush.msra.mxu0 %v56
    %401 = vmatpush.msra.mxu0 %v54
    %402 = vmatpush.msra.mxu0 %v52
    %403 = vmatpush.msra.mxu0 %v50
    %404 = vmatpush.msra.mxu0 %v48
    %405 = vmatpush.msra.mxu0 %v46
    %406 = vmatmul.f32.gmra.mxu0 %v388
    %v407 = vpop.f32.mrf.mxu0
    %v408 = vadd.f32 %v383, %v407
    %409 = vdwg.mxu0
    %410 = vmatpush.msra.mxu0 0.0
    %411 = vmatpush.msra.mxu0 0.0
    %412 = vmatpush.msra.mxu0 0.0
    %413 = vmatpush.msra.mxu0 0.0
    %414 = vmatpush.msra.mxu0 0.0
    %415 = vmatpush.msra.mxu0 0.0
    %416 = vmatpush.msra.mxu0 0.0
    %417 = vmatpush.msra.mxu0 0.0
    %418 = vmatpush.msra.mxu0 %v61
    %419 = vmatpush.msra.mxu0 %v59
    %420 = vmatpush.msra.mxu0 %v57
    %421 = vmatpush.msra.mxu0 %v55
    %422 = vmatpush.msra.mxu0 %v53
    %423 = vmatpush.msra.mxu0 %v51
    %424 = vmatpush.msra.mxu0 %v49
    %425 = vmatpush.msra.mxu0 %v47
    %426 = vmatmul.f32.gmra.mxu0 %v388
    %v427 = vpop.f32.mrf.mxu0
    %v428 = vadd.f32 %v384, %v427
    %429 = vdwg.mxu0
    %v430 = vxor.u32 %v408, 2147483648
    %v431 = vxor.u32 %v428, 2147483648
    %v432 = vmul.f32 %v430, 1.442695
    %v433 = vpow.pop %v432
    %v434 = vmul.f32 %v431, 1.442695
    %v435 = vpow.pop %v434
    %v436 = vadd.f32 %v433, 1.0
    %v437 = vadd.f32 %v435, 1.0
    %v438 = vrcp.pop %v436
    %v439 = vmul.f32 %v436, %v438
    %v440 = vsub.f32 1.0, %v439
    %v441 = vmul.f32 %v438, %v440
    %v442 = vadd.f32 %v438, %v441
    %vm443 = vweird.f32 %v436
    %vm444 = vweird.f32 %v438
    %vm445 = vmor %vm443, %vm444
    %v446 = vsel %vm445, %v438, %v442
    %v447 = vand.u32 2147483647, %v436
    %vm448 = vcmp.eq.f32.partialorder %v447, 8.507059e+37
    %v449 = vand.u32 %v436, 2147483648
    %v450 = vor.u32 1.1754944e-38, %v449
    %v451 = vsel %vm448, %v450, %v446
    %v452 = vmul.f32 1.0, %v451
    %v453 = vrcp.pop %v437
    %v454 = vmul.f32 %v437, %v453
    %v455 = vsub.f32 1.0, %v454
    %v456 = vmul.f32 %v453, %v455
    %v457 = vadd.f32 %v453, %v456
    %vm458 = vweird.f32 %v437
    %vm459 = vweird.f32 %v453
    %vm460 = vmor %vm458, %vm459
    %v461 = vsel %vm460, %v453, %v457
    %v462 = vand.u32 2147483647, %v437
    %vm463 = vcmp.eq.f32.partialorder %v462, 8.507059e+37
    %v464 = vand.u32 %v437, 2147483648
    %v465 = vor.u32 1.1754944e-38, %v464
    %v466 = vsel %vm463, %v465, %v461
    %v467 = vmul.f32 1.0, %v466
    %v468 = vmul.f32 %v452, 2.0
    %v469 = vmul.f32 %v467, 2.0
    %v470 = vsub.f32 %v468, 1.0
    %v471 = vsub.f32 %v469, 1.0
    %v472 = vsel %vm65, %v470, %v452
    %v473 = vsel %vm66, %v471, %v467
    %v474 = vmul.f32 %v472, %v376
    %v475 = vmul.f32 %v472, %v473
    %477 = vrot.lane.b32.xlu0 %v475, 64
    %v478 = vpop.permute.xlu0 %477
    %v480 = vadd.f32 %v474, %v478
    %v481 = vtanh.pop %v480
    %v482 = vmul.f32 %v473, %v481
    %483 = vst.msk [vmem:[#allocation7 + $0x3] sm:$0x1] %vm170, %v482
    %s484 = scalar_lea.vmem [#allocation2], 4
    %v485 = vld [vmem:[%s484] ss:$8 sm:$0x3]
    %v487 = vperm.slane %v485, 0
    %v488 = vperm.slane %v485, 1
    %v492 = vsel %vm73, %v482, 0
    %494 = vmatpush.msra.mxu0 0.0
    %495 = vmatpush.msra.mxu0 0.0
    %496 = vmatpush.msra.mxu0 0.0
    %497 = vmatpush.msra.mxu0 0.0
    %498 = vmatpush.msra.mxu0 0.0
    %499 = vmatpush.msra.mxu0 0.0
    %500 = vmatpush.msra.mxu0 0.0
    %501 = vmatpush.msra.mxu0 0.0
    %502 = vmatpush.msra.mxu0 %v60
    %503 = vmatpush.msra.mxu0 %v58
    %504 = vmatpush.msra.mxu0 %v56
    %505 = vmatpush.msra.mxu0 %v54
    %506 = vmatpush.msra.mxu0 %v52
    %507 = vmatpush.msra.mxu0 %v50
    %508 = vmatpush.msra.mxu0 %v48
    %509 = vmatpush.msra.mxu0 %v46
    %510 = vmatmul.f32.gmra.mxu0 %v492
    %v511 = vpop.f32.mrf.mxu0
    %v512 = vadd.f32 %v487, %v511
    %513 = vdwg.mxu0
    %514 = vmatpush.msra.mxu0 0.0
    %515 = vmatpush.msra.mxu0 0.0
    %516 = vmatpush.msra.mxu0 0.0
    %517 = vmatpush.msra.mxu0 0.0
    %518 = vmatpush.msra.mxu0 0.0
    %519 = vmatpush.msra.mxu0 0.0
    %520 = vmatpush.msra.mxu0 0.0
    %521 = vmatpush.msra.mxu0 0.0
    %522 = vmatpush.msra.mxu0 %v61
    %523 = vmatpush.msra.mxu0 %v59
    %524 = vmatpush.msra.mxu0 %v57
    %525 = vmatpush.msra.mxu0 %v55
    %526 = vmatpush.msra.mxu0 %v53
    %527 = vmatpush.msra.mxu0 %v51
    %528 = vmatpush.msra.mxu0 %v49
    %529 = vmatpush.msra.mxu0 %v47
    %530 = vmatmul.f32.gmra.mxu0 %v492
    %v531 = vpop.f32.mrf.mxu0
    %v532 = vadd.f32 %v488, %v531
    %533 = vdwg.mxu0
    %v534 = vxor.u32 %v512, 2147483648
    %v535 = vxor.u32 %v532, 2147483648
    %v536 = vmul.f32 %v534, 1.442695
    %v537 = vpow.pop %v536
    %v538 = vmul.f32 %v535, 1.442695
    %v539 = vpow.pop %v538
    %v540 = vadd.f32 %v537, 1.0
    %v541 = vadd.f32 %v539, 1.0
    %v542 = vrcp.pop %v540
    %v543 = vmul.f32 %v540, %v542
    %v544 = vsub.f32 1.0, %v543
    %v545 = vmul.f32 %v542, %v544
    %v546 = vadd.f32 %v542, %v545
    %vm547 = vweird.f32 %v540
    %vm548 = vweird.f32 %v542
    %vm549 = vmor %vm547, %vm548
    %v550 = vsel %vm549, %v542, %v546
    %v551 = vand.u32 2147483647, %v540
    %vm552 = vcmp.eq.f32.partialorder %v551, 8.507059e+37
    %v553 = vand.u32 %v540, 2147483648
    %v554 = vor.u32 1.1754944e-38, %v553
    %v555 = vsel %vm552, %v554, %v550
    %v556 = vmul.f32 1.0, %v555
    %v557 = vrcp.pop %v541
    %v558 = vmul.f32 %v541, %v557
    %v559 = vsub.f32 1.0, %v558
    %v560 = vmul.f32 %v557, %v559
    %v561 = vadd.f32 %v557, %v560
    %vm562 = vweird.f32 %v541
    %vm563 = vweird.f32 %v557
    %vm564 = vmor %vm562, %vm563
    %v565 = vsel %vm564, %v557, %v561
    %v566 = vand.u32 2147483647, %v541
    %vm567 = vcmp.eq.f32.partialorder %v566, 8.507059e+37
    %v568 = vand.u32 %v541, 2147483648
    %v569 = vor.u32 1.1754944e-38, %v568
    %v570 = vsel %vm567, %v569, %v565
    %v571 = vmul.f32 1.0, %v570
    %v572 = vmul.f32 %v556, 2.0
    %v573 = vmul.f32 %v571, 2.0
    %v574 = vsub.f32 %v572, 1.0
    %v575 = vsub.f32 %v573, 1.0
    %v576 = vsel %vm65, %v574, %v556
    %v577 = vsel %vm66, %v575, %v571
    %v578 = vmul.f32 %v576, %v480
    %v579 = vmul.f32 %v576, %v577
    %581 = vrot.lane.b32.xlu0 %v579, 64
    %v582 = vpop.permute.xlu0 %581
    %v584 = vadd.f32 %v578, %v582
    %v585 = vtanh.pop %v584
    %v586 = vmul.f32 %v577, %v585
    %587 = vst.msk [vmem:[#allocation7 + $0x4] sm:$0x1] %vm170, %v586
    %s588 = scalar_lea.vmem [#allocation2], 5
    %v589 = vld [vmem:[%s588] ss:$8 sm:$0x3]
    %v591 = vperm.slane %v589, 0
    %v592 = vperm.slane %v589, 1
    %v596 = vsel %vm73, %v586, 0
    %598 = vmatpush.msra.mxu0 0.0
    %599 = vmatpush.msra.mxu0 0.0
    %600 = vmatpush.msra.mxu0 0.0
    %601 = vmatpush.msra.mxu0 0.0
    %602 = vmatpush.msra.mxu0 0.0
    %603 = vmatpush.msra.mxu0 0.0
    %604 = vmatpush.msra.mxu0 0.0
    %605 = vmatpush.msra.mxu0 0.0
    %606 = vmatpush.msra.mxu0 %v60
    %607 = vmatpush.msra.mxu0 %v58
    %608 = vmatpush.msra.mxu0 %v56
    %609 = vmatpush.msra.mxu0 %v54
    %610 = vmatpush.msra.mxu0 %v52
    %611 = vmatpush.msra.mxu0 %v50
    %612 = vmatpush.msra.mxu0 %v48
    %613 = vmatpush.msra.mxu0 %v46
    %614 = vmatmul.f32.gmra.mxu0 %v596
    %v615 = vpop.f32.mrf.mxu0
    %v616 = vadd.f32 %v591, %v615
    %617 = vdwg.mxu0
    %618 = vmatpush.msra.mxu0 0.0
    %619 = vmatpush.msra.mxu0 0.0
    %620 = vmatpush.msra.mxu0 0.0
    %621 = vmatpush.msra.mxu0 0.0
    %622 = vmatpush.msra.mxu0 0.0
    %623 = vmatpush.msra.mxu0 0.0
    %624 = vmatpush.msra.mxu0 0.0
    %625 = vmatpush.msra.mxu0 0.0
    %626 = vmatpush.msra.mxu0 %v61
    %627 = vmatpush.msra.mxu0 %v59
    %628 = vmatpush.msra.mxu0 %v57
    %629 = vmatpush.msra.mxu0 %v55
    %630 = vmatpush.msra.mxu0 %v53
    %631 = vmatpush.msra.mxu0 %v51
    %632 = vmatpush.msra.mxu0 %v49
    %633 = vmatpush.msra.mxu0 %v47
    %634 = vmatmul.f32.gmra.mxu0 %v596
    %v635 = vpop.f32.mrf.mxu0
    %v636 = vadd.f32 %v592, %v635
    %637 = vdwg.mxu0
    %v638 = vxor.u32 %v616, 2147483648
    %v639 = vxor.u32 %v636, 2147483648
    %v640 = vmul.f32 %v638, 1.442695
    %v641 = vpow.pop %v640
    %v642 = vmul.f32 %v639, 1.442695
    %v643 = vpow.pop %v642
    %v644 = vadd.f32 %v641, 1.0
    %v645 = vadd.f32 %v643, 1.0
    %v646 = vrcp.pop %v644
    %v647 = vmul.f32 %v644, %v646
    %v648 = vsub.f32 1.0, %v647
    %v649 = vmul.f32 %v646, %v648
    %v650 = vadd.f32 %v646, %v649
    %vm651 = vweird.f32 %v644
    %vm652 = vweird.f32 %v646
    %vm653 = vmor %vm651, %vm652
    %v654 = vsel %vm653, %v646, %v650
    %v655 = vand.u32 2147483647, %v644
    %vm656 = vcmp.eq.f32.partialorder %v655, 8.507059e+37
    %v657 = vand.u32 %v644, 2147483648
    %v658 = vor.u32 1.1754944e-38, %v657
    %v659 = vsel %vm656, %v658, %v654
    %v660 = vmul.f32 1.0, %v659
    %v661 = vrcp.pop %v645
    %v662 = vmul.f32 %v645, %v661
    %v663 = vsub.f32 1.0, %v662
    %v664 = vmul.f32 %v661, %v663
    %v665 = vadd.f32 %v661, %v664
    %vm666 = vweird.f32 %v645
    %vm667 = vweird.f32 %v661
    %vm668 = vmor %vm666, %vm667
    %v669 = vsel %vm668, %v661, %v665
    %v670 = vand.u32 2147483647, %v645
    %vm671 = vcmp.eq.f32.partialorder %v670, 8.507059e+37
    %v672 = vand.u32 %v645, 2147483648
    %v673 = vor.u32 1.1754944e-38, %v672
    %v674 = vsel %vm671, %v673, %v669
    %v675 = vmul.f32 1.0, %v674
    %v676 = vmul.f32 %v660, 2.0
    %v677 = vmul.f32 %v675, 2.0
    %v678 = vsub.f32 %v676, 1.0
    %v679 = vsub.f32 %v677, 1.0
    %v680 = vsel %vm65, %v678, %v660
    %v681 = vsel %vm66, %v679, %v675
    %v682 = vmul.f32 %v680, %v584
    %v683 = vmul.f32 %v680, %v681
    %685 = vrot.lane.b32.xlu0 %v683, 64
    %v686 = vpop.permute.xlu0 %685
    %v688 = vadd.f32 %v682, %v686
    %v689 = vtanh.pop %v688
    %v690 = vmul.f32 %v681, %v689
    %691 = vst.msk [vmem:[#allocation7 + $0x5] sm:$0x1] %vm170, %v690
    %s692 = scalar_lea.vmem [#allocation2], 6
    %v693 = vld [vmem:[%s692] ss:$8 sm:$0x3]
    %v695 = vperm.slane %v693, 0
    %v696 = vperm.slane %v693, 1
    %v700 = vsel %vm73, %v690, 0
    %702 = vmatpush.msra.mxu0 0.0
    %703 = vmatpush.msra.mxu0 0.0
    %704 = vmatpush.msra.mxu0 0.0
    %705 = vmatpush.msra.mxu0 0.0
    %706 = vmatpush.msra.mxu0 0.0
    %707 = vmatpush.msra.mxu0 0.0
    %708 = vmatpush.msra.mxu0 0.0
    %709 = vmatpush.msra.mxu0 0.0
    %710 = vmatpush.msra.mxu0 %v60
    %711 = vmatpush.msra.mxu0 %v58
    %712 = vmatpush.msra.mxu0 %v56
    %713 = vmatpush.msra.mxu0 %v54
    %714 = vmatpush.msra.mxu0 %v52
    %715 = vmatpush.msra.mxu0 %v50
    %716 = vmatpush.msra.mxu0 %v48
    %717 = vmatpush.msra.mxu0 %v46
    %718 = vmatmul.f32.gmra.mxu0 %v700
    %v719 = vpop.f32.mrf.mxu0
    %v720 = vadd.f32 %v695, %v719
    %721 = vdwg.mxu0
    %722 = vmatpush.msra.mxu0 0.0
    %723 = vmatpush.msra.mxu0 0.0
    %724 = vmatpush.msra.mxu0 0.0
    %725 = vmatpush.msra.mxu0 0.0
    %726 = vmatpush.msra.mxu0 0.0
    %727 = vmatpush.msra.mxu0 0.0
    %728 = vmatpush.msra.mxu0 0.0
    %729 = vmatpush.msra.mxu0 0.0
    %730 = vmatpush.msra.mxu0 %v61
    %731 = vmatpush.msra.mxu0 %v59
    %732 = vmatpush.msra.mxu0 %v57
    %733 = vmatpush.msra.mxu0 %v55
    %734 = vmatpush.msra.mxu0 %v53
    %735 = vmatpush.msra.mxu0 %v51
    %736 = vmatpush.msra.mxu0 %v49
    %737 = vmatpush.msra.mxu0 %v47
    %738 = vmatmul.f32.gmra.mxu0 %v700
    %v739 = vpop.f32.mrf.mxu0
    %v740 = vadd.f32 %v696, %v739
    %741 = vdwg.mxu0
    %v742 = vxor.u32 %v720, 2147483648
    %v743 = vxor.u32 %v740, 2147483648
    %v744 = vmul.f32 %v742, 1.442695
    %v745 = vpow.pop %v744
    %v746 = vmul.f32 %v743, 1.442695
    %v747 = vpow.pop %v746
    %v748 = vadd.f32 %v745, 1.0
    %v749 = vadd.f32 %v747, 1.0
    %v750 = vrcp.pop %v748
    %v751 = vmul.f32 %v748, %v750
    %v752 = vsub.f32 1.0, %v751
    %v753 = vmul.f32 %v750, %v752
    %v754 = vadd.f32 %v750, %v753
    %vm755 = vweird.f32 %v748
    %vm756 = vweird.f32 %v750
    %vm757 = vmor %vm755, %vm756
    %v758 = vsel %vm757, %v750, %v754
    %v759 = vand.u32 2147483647, %v748
    %vm760 = vcmp.eq.f32.partialorder %v759, 8.507059e+37
    %v761 = vand.u32 %v748, 2147483648
    %v762 = vor.u32 1.1754944e-38, %v761
    %v763 = vsel %vm760, %v762, %v758
    %v764 = vmul.f32 1.0, %v763
    %v765 = vrcp.pop %v749
    %v766 = vmul.f32 %v749, %v765
    %v767 = vsub.f32 1.0, %v766
    %v768 = vmul.f32 %v765, %v767
    %v769 = vadd.f32 %v765, %v768
    %vm770 = vweird.f32 %v749
    %vm771 = vweird.f32 %v765
    %vm772 = vmor %vm770, %vm771
    %v773 = vsel %vm772, %v765, %v769
    %v774 = vand.u32 2147483647, %v749
    %vm775 = vcmp.eq.f32.partialorder %v774, 8.507059e+37
    %v776 = vand.u32 %v749, 2147483648
    %v777 = vor.u32 1.1754944e-38, %v776
    %v778 = vsel %vm775, %v777, %v773
    %v779 = vmul.f32 1.0, %v778
    %v780 = vmul.f32 %v764, 2.0
    %v781 = vmul.f32 %v779, 2.0
    %v782 = vsub.f32 %v780, 1.0
    %v783 = vsub.f32 %v781, 1.0
    %v784 = vsel %vm65, %v782, %v764
    %v785 = vsel %vm66, %v783, %v779
    %v786 = vmul.f32 %v784, %v688
    %v787 = vmul.f32 %v784, %v785
    %789 = vrot.lane.b32.xlu0 %v787, 64
    %v790 = vpop.permute.xlu0 %789
    %v792 = vadd.f32 %v786, %v790
    %v793 = vtanh.pop %v792
    %v794 = vmul.f32 %v785, %v793
    %795 = vst.msk [vmem:[#allocation7 + $0x6] sm:$0x1] %vm170, %v794
    %s796 = scalar_lea.vmem [#allocation2], 7
    %v797 = vld [vmem:[%s796] ss:$8 sm:$0x3]
    %v799 = vperm.slane %v797, 0
    %v800 = vperm.slane %v797, 1
    %v804 = vsel %vm73, %v794, 0
    %806 = vmatpush.msra.mxu0 0.0
    %807 = vmatpush.msra.mxu0 0.0
    %808 = vmatpush.msra.mxu0 0.0
    %809 = vmatpush.msra.mxu0 0.0
    %810 = vmatpush.msra.mxu0 0.0
    %811 = vmatpush.msra.mxu0 0.0
    %812 = vmatpush.msra.mxu0 0.0
    %813 = vmatpush.msra.mxu0 0.0
    %814 = vmatpush.msra.mxu0 %v60
    %815 = vmatpush.msra.mxu0 %v58
    %816 = vmatpush.msra.mxu0 %v56
    %817 = vmatpush.msra.mxu0 %v54
    %818 = vmatpush.msra.mxu0 %v52
    %819 = vmatpush.msra.mxu0 %v50
    %820 = vmatpush.msra.mxu0 %v48
    %821 = vmatpush.msra.mxu0 %v46
    %822 = vmatmul.f32.gmra.mxu0 %v804
    %v823 = vpop.f32.mrf.mxu0
    %v824 = vadd.f32 %v799, %v823
    %825 = vdwg.mxu0
    %826 = vmatpush.msra.mxu0 0.0
    %827 = vmatpush.msra.mxu0 0.0
    %828 = vmatpush.msra.mxu0 0.0
    %829 = vmatpush.msra.mxu0 0.0
    %830 = vmatpush.msra.mxu0 0.0
    %831 = vmatpush.msra.mxu0 0.0
    %832 = vmatpush.msra.mxu0 0.0
    %833 = vmatpush.msra.mxu0 0.0
    %834 = vmatpush.msra.mxu0 %v61
    %835 = vmatpush.msra.mxu0 %v59
    %836 = vmatpush.msra.mxu0 %v57
    %837 = vmatpush.msra.mxu0 %v55
    %838 = vmatpush.msra.mxu0 %v53
    %839 = vmatpush.msra.mxu0 %v51
    %840 = vmatpush.msra.mxu0 %v49
    %841 = vmatpush.msra.mxu0 %v47
    %842 = vmatmul.f32.gmra.mxu0 %v804
    %v843 = vpop.f32.mrf.mxu0
    %v844 = vadd.f32 %v800, %v843
    %845 = vdwg.mxu0
    %v846 = vxor.u32 %v824, 2147483648
    %v847 = vxor.u32 %v844, 2147483648
    %v848 = vmul.f32 %v846, 1.442695
    %v849 = vpow.pop %v848
    %v850 = vmul.f32 %v847, 1.442695
    %v851 = vpow.pop %v850
    %v852 = vadd.f32 %v849, 1.0
    %v853 = vadd.f32 %v851, 1.0
    %v854 = vrcp.pop %v852
    %v855 = vmul.f32 %v852, %v854
    %v856 = vsub.f32 1.0, %v855
    %v857 = vmul.f32 %v854, %v856
    %v858 = vadd.f32 %v854, %v857
    %vm859 = vweird.f32 %v852
    %vm860 = vweird.f32 %v854
    %vm861 = vmor %vm859, %vm860
    %v862 = vsel %vm861, %v854, %v858
    %v863 = vand.u32 2147483647, %v852
    %vm864 = vcmp.eq.f32.partialorder %v863, 8.507059e+37
    %v865 = vand.u32 %v852, 2147483648
    %v866 = vor.u32 1.1754944e-38, %v865
    %v867 = vsel %vm864, %v866, %v862
    %v868 = vmul.f32 1.0, %v867
    %v869 = vrcp.pop %v853
    %v870 = vmul.f32 %v853, %v869
    %v871 = vsub.f32 1.0, %v870
    %v872 = vmul.f32 %v869, %v871
    %v873 = vadd.f32 %v869, %v872
    %vm874 = vweird.f32 %v853
    %vm875 = vweird.f32 %v869
    %vm876 = vmor %vm874, %vm875
    %v877 = vsel %vm876, %v869, %v873
    %v878 = vand.u32 2147483647, %v853
    %vm879 = vcmp.eq.f32.partialorder %v878, 8.507059e+37
    %v880 = vand.u32 %v853, 2147483648
    %v881 = vor.u32 1.1754944e-38, %v880
    %v882 = vsel %vm879, %v881, %v877
    %v883 = vmul.f32 1.0, %v882
    %v884 = vmul.f32 %v868, 2.0
    %v885 = vmul.f32 %v883, 2.0
    %v886 = vsub.f32 %v884, 1.0
    %v887 = vsub.f32 %v885, 1.0
    %v888 = vsel %vm65, %v886, %v868
    %v889 = vsel %vm66, %v887, %v883
    %v890 = vmul.f32 %v888, %v792
    %v891 = vmul.f32 %v888, %v889
    %893 = vrot.lane.b32.xlu0 %v891, 64
    %v894 = vpop.permute.xlu0 %893
    %v896 = vadd.f32 %v890, %v894
    %v897 = vtanh.pop %v896
    %v898 = vmul.f32 %v889, %v897
    %899 = vst.msk [vmem:[#allocation7 + $0x7] sm:$0x1] %vm170, %v898
    %901 = vrot.lane.b32.xlu0 %v898, 96
    %v902 = vpop.permute.xlu0 %901
    %vm904 = vcmask 253952
    %905 = vst.msk [vmem:[#allocation8] sm:$0x1] %vm904, %v902
    %907 = vrot.lane.b32.xlu0 %v896, 96
    %v908 = vpop.permute.xlu0 %907
    %910 = vst.msk [vmem:[#allocation10] sm:$0x1] %vm904, %v908
    // Predicated region
    $region18: #{tpu_custom_call.1} parent=1 // pred_check
      _
    $region19: #{tpu_custom_call.1} parent=1 // pred_check_branch
      %912 = sbr.rel (0) target = $region21
    $region20: #{tpu_custom_call.1} parent=1 // pred_region
      %914 = vsyncadd [#allocation4], 0
      %s916 = sshll.u32 [#allocation7], 4
      %s917 = int_to_ptr.vmem [resolvable:$true] %s916
      %s918 = sshll.u32 %s2, 4
      %s919 = int_to_ptr.hbm [resolvable:$true] %s918
      %921 = dma.vmem_to_hbm [thread:$0]  %s917, 128, %s919, [#allocation4]
    $region21: #{tpu_custom_call.1} parent=1 // pred_fallthru
      _
    // Predicated region
    $region22: #{tpu_custom_call.1} parent=1 // pred_check
      _
    $region23: #{tpu_custom_call.1} parent=1 // pred_check_branch
      %923 = sbr.rel (0) target = $region25
    $region24: #{tpu_custom_call.1} parent=1 // pred_region
      %925 = vsyncadd [#allocation9], 0
      %s927 = sshll.u32 [#allocation8], 4
      %s928 = int_to_ptr.vmem [resolvable:$true] %s927
      %s929 = sshll.u32 %s3, 4
      %s930 = int_to_ptr.hbm [resolvable:$true] %s929
      %932 = dma.vmem_to_hbm [thread:$0]  %s928, 16, %s930, [#allocation9]
    $region25: #{tpu_custom_call.1} parent=1 // pred_fallthru
      _
    // Predicated region
    $region26: #{tpu_custom_call.1} parent=1 // pred_check
      _
    $region27: #{tpu_custom_call.1} parent=1 // pred_check_branch
      %934 = sbr.rel (0) target = $region29
    $region28: #{tpu_custom_call.1} parent=1 // pred_region
      %936 = vsyncadd [#allocation9], 0
      %s938 = sshll.u32 [#allocation10], 4
      %s939 = int_to_ptr.vmem [resolvable:$true] %s938
      %s940 = sshll.u32 %s4, 4
      %s941 = int_to_ptr.hbm [resolvable:$true] %s940
      %943 = dma.vmem_to_hbm [thread:$0]  %s939, 16, %s941, [#allocation9]
    $region29: #{tpu_custom_call.1} parent=1 // pred_fallthru
      _
    // Predicated region
    $region30: #{tpu_custom_call.1} parent=1 // pred_check
      _
    $region31: #{tpu_custom_call.1} parent=1 // pred_check_branch
      %945 = sbr.rel (0) target = $region33
    $region32: #{tpu_custom_call.1} parent=1 // pred_region
      %947 = dma.done [#allocation4], 128
    $region33: #{tpu_custom_call.1} parent=1 // pred_fallthru
      _
    // Predicated region
    $region34: #{tpu_custom_call.1} parent=1 // pred_check
      _
    $region35: #{tpu_custom_call.1} parent=1 // pred_check_branch
      %949 = sbr.rel (0) target = $region37
    $region36: #{tpu_custom_call.1} parent=1 // pred_region
      %951 = dma.done [#allocation9], 16
    $region37: #{tpu_custom_call.1} parent=1 // pred_fallthru
      _
    // Predicated region
    $region38: #{tpu_custom_call.1} parent=1 // pred_check
      _
    $region39: #{tpu_custom_call.1} parent=1 // pred_check_branch
      %953 = sbr.rel (0) target = $region41
    $region40: #{tpu_custom_call.1} parent=1 // pred_region
      %955 = dma.done [#allocation9], 16
    $region41: #{tpu_custom_call.1} parent=1 // pred_fallthru
      _
    %956 = vsyncpa [#allocation3], 1
    %957 = vsyncpa [#allocation6], 1
    %958 = vsyncpa [#allocation4], 1
    %959 = vsyncpa [#allocation9], 1

</llo_original>
